<compile_context>
chip_gen: v7x
topology: tpu7x:2x2x1
jax: 0.10.0
libtpu: 0.0.40
codegen_flags: <defaults>
</compile_context>

<pallas_src>
import jax
import jax.numpy as jnp
import numpy as np
from jax.experimental import pallas as pl
from jax.experimental.pallas import tpu as pltpu


# ----------------------------------------------------------------------------
# Kernel: one (1, TH, W) row tile of one image pair per grid step.
# Emits the per-tile, per-column partial sum (1, 1, W) of the per-pixel loss.
# ----------------------------------------------------------------------------
def _ime_loss_kernel(out_ref, dep_ref, ohalo_ref, dhalo_ref, psum_ref):
    _, TH, W = out_ref.shape

    col = jax.lax.broadcasted_iota(jnp.int32, (TH, W), 1)
    not_first_col = col != 0
    not_last_col = col != (W - 1)

    def left_nbr(a):   # a[:, j-1], zero at the left image border (j == 0)
        return jnp.where(not_first_col, pltpu.roll(a, 1, axis=1), 0.0)

    def right_nbr(a):  # a[:, j+1], zero at the right image border (j == W-1)
        return jnp.where(not_last_col, pltpu.roll(a, W - 1, axis=1), 0.0)

    def sobel(img_ref, halo_ref):
        x = img_ref[0].astype(jnp.float32)        # (TH, W) tile rows
        halo = halo_ref[0].astype(jnp.float32)    # (2, W): row above / row below
        top = jnp.concatenate([halo[0:1, :], x[: TH - 1, :]], axis=0)   # x[i-1]
        bot = jnp.concatenate([x[1:, :], halo[1:2, :]], axis=0)         # x[i+1]
        s = top + (x + x) + bot                    # vertical [1, 2, 1]
        dv = top - bot                             # vertical [1, 0, -1]
        dx = left_nbr(s) - right_nbr(s)            # horizontal [1, 0, -1]
        dy = left_nbr(dv) + (dv + dv) + right_nbr(dv)  # horizontal [1, 2, 1]
        return x, dx, dy

    o, odx, ody = sobel(out_ref, ohalo_ref)
    d, ddx, ddy = sobel(dep_ref, dhalo_ref)

    # log(a) + log(b) + log(c) == log(a*b) + log(c): 2 EUP logs/pixel with huge
    # f32 overflow headroom (addresses review correctness concern).
    a = jnp.abs(o - d) + 0.5
    b = jnp.abs(odx - ddx) + 0.5
    c = jnp.abs(ody - ddy) + 0.5
    log_term = jnp.log(a * b) + jnp.log(c)

    # Cosine similarity of (-odx, -ody, 1) vs (-ddx, -ddy, 1); denominators >= 1
    # so eps=0 is safe.  One rsqrt + mul instead of 2x sqrt + divide.
    dot = odx * ddx + ody * ddy + 1.0
    na2 = odx * odx + ody * ody + 1.0
    nb2 = ddx * ddx + ddy * ddy + 1.0
    normal_term = jnp.abs(1.0 - dot * jax.lax.rsqrt(na2 * nb2))

    # Sublane-axis reduction only; the cross-lane reduce happens once in the
    # wrapper over the tiny per-tile partial sums.
    psum_ref[...] = (
        jnp.sum(log_term + normal_term, axis=0, keepdims=True)
        .reshape(psum_ref.shape)
        .astype(jnp.float32)
    )


# ----------------------------------------------------------------------------
# Wrapper helpers
# ----------------------------------------------------------------------------
def _pick_row_tile(H, W, max_tile_elems=128 * 1024):
    """Largest row tile TH with H % TH == 0, (TH % 8 == 0 or TH == H), and
    TH * W within a per-plane element budget that keeps VMEM < 32 MiB."""
    candidates = [H] + [t for t in range(8, H, 8) if H % t == 0]
    within = [t for t in candidates if t * W <= max_tile_elems]
    if within:
        return max(within)
    return min(candidates)


def _build_halos(img, th):
    """(B, H, W) -> (B*nT, 2, W): for every row tile the image row directly
    above and below it (zeros at the image border, matching zero padding)."""
    B, H, W = img.shape
    nT = H // th
    zero_row = jnp.zeros((B, 1, W), img.dtype)
    if nT > 1:
        above = jnp.concatenate(
            [zero_row, img[:, th - 1::th, :][:, : nT - 1, :]], axis=1)
        below = jnp.concatenate([img[:, th::th, :], zero_row], axis=1)
    else:
        above = zero_row
        below = zero_row
    return jnp.stack([above, below], axis=2).reshape(B * nT, 2, W)


# ----------------------------------------------------------------------------
# Wrapper: NCHW (B, 1, H, W) inputs -> scalar loss
# ----------------------------------------------------------------------------
def ime_loss(output_nchw: jnp.ndarray, depth_nchw: jnp.ndarray, *,
             row_tile: int | None = None) -> jnp.ndarray:
    assert output_nchw.shape == depth_nchw.shape
    B, C, H, W = output_nchw.shape
    assert C == 1, "ImeSobel expects single-channel inputs"

    out_img = output_nchw.reshape(B, H, W)   # free: channel dim is 1
    dep_img = depth_nchw.reshape(B, H, W)

    TH = _pick_row_tile(H, W) if row_tile is None else row_tile
    assert H % TH == 0 and (TH == H or TH % 8 == 0), (
        f"row tile {TH} must divide H={H} and be a multiple of 8 (or equal H)")
    nT = H // TH

    out_halo = _build_halos(out_img, TH)     # (B*nT, 2, W), tiny
    dep_halo = _build_halos(dep_img, TH)

    psums = pl.pallas_call(
        _ime_loss_kernel,
        out_shape=jax.ShapeDtypeStruct((B * nT, 1, W), jnp.float32),
        grid=(B, nT),
        in_specs=[
            pl.BlockSpec((1, TH, W), lambda b, rt: (b, rt, 0)),
            pl.BlockSpec((1, TH, W), lambda b, rt: (b, rt, 0)),
            pl.BlockSpec((1, 2, W), lambda b, rt: (b * nT + rt, 0, 0)),
            pl.BlockSpec((1, 2, W), lambda b, rt: (b * nT + rt, 0, 0)),
        ],
        out_specs=pl.BlockSpec((1, 1, W), lambda b, rt: (b * nT + rt, 0, 0)),
        compiler_params=pltpu.CompilerParams(
            # Every step writes its own output block -> both axes fully
            # parallel; on v7x the two TensorCores split batch*row-tiles even
            # when B == 1.
            dimension_semantics=("parallel", "parallel"),
            # Re-budgeted for v7x (64 MiB physical VMEM); row tiling keeps the
            # per-step footprint far below this on all chips.
            vmem_limit_bytes=32 * 1024 * 1024,
        ),
    )(out_img, dep_img, out_halo, dep_halo)

    return jnp.sum(psums) / (B * H * W)


# ----------------------------------------------------------------------------
# Pure-JAX reference mirroring the PyTorch module op-for-op.
# ----------------------------------------------------------------------------
def _ime_loss_ref(output_nchw, depth_nchw):
    B, _, H, W = output_nchw.shape
    kx = jnp.array([[1, 0, -1], [2, 0, -2], [1, 0, -1]], jnp.float32)
    ky = jnp.array([[1, 2, 1], [0, 0, 0], [-1, -2, -1]], jnp.float32)

    def sobel(x):  # x: (B, H, W)
        xp = jnp.pad(x, ((0, 0), (1, 1), (1, 1)))
        dx = jnp.zeros_like(x)
        dy = jnp.zeros_like(x)
        for ki in range(3):
            for kj in range(3):
                win = xp[:, ki:ki + H, kj:kj + W]
                dx = dx + kx[ki, kj] * win
                dy = dy + ky[ki, kj] * win
        return dx, dy

    o = output_nchw[:, 0].astype(jnp.float32)
    d = depth_nchw[:, 0].astype(jnp.float32)
    odx, ody = sobel(o)
    ddx, ddy = sobel(d)
    loss_depth = jnp.mean(jnp.log(jnp.abs(o - d) + 0.5))
    loss_dx = jnp.mean(jnp.log(jnp.abs(odx - ddx) + 0.5))
    loss_dy = jnp.mean(jnp.log(jnp.abs(ody - ddy) + 0.5))
    dot = odx * ddx + ody * ddy + 1.0
    na = jnp.sqrt(odx ** 2 + ody ** 2 + 1.0)
    nb = jnp.sqrt(ddx ** 2 + ddy ** 2 + 1.0)
    loss_normal = jnp.mean(jnp.abs(1.0 - dot / (na * nb)))
    return loss_depth + loss_normal + (loss_dx + loss_dy)


if __name__ == "__main__":
    # Lane-dense width (real depth maps — 640/1024 — are 128-multiples too).
    B, C, H, W = 2, 1, 16, 128
    key = jax.random.PRNGKey(0)
    k1, k2 = jax.random.split(key)
    output = jax.random.normal(k1, (B, C, H, W), dtype=jnp.float32)
    depth = jax.random.normal(k2, (B, C, H, W), dtype=jnp.float32)

    ref = jax.block_until_ready(_ime_loss_ref(output, depth))

    # Default tiling (single row tile at this small H) ...
    loss_a = jax.block_until_ready(ime_loss(output, depth))
    # ... and a forced multi-tile run to exercise the row-halo path.
    loss_b = jax.block_until_ready(ime_loss(output, depth, row_tile=8))

    np.testing.assert_allclose(np.asarray(loss_a), np.asarray(ref),
                               rtol=2e-4, atol=2e-4)
    np.testing.assert_allclose(np.asarray(loss_b), np.asarray(ref),
                               rtol=2e-4, atol=2e-4)
    assert np.isfinite(np.asarray(loss_a)) and np.isfinite(np.asarray(loss_b))
    print("KERNEL_OK")
</pallas_src>

<mosaic_0001>
module attributes {stable_mosaic.version = 11 : i64} {
  func.func @_ime_loss_kernel(%arg0: i32, %arg1: i32, %arg2: memref<1x16x128xf32, #tpu.memory_space<vmem>>, %arg3: memref<1x16x128xf32, #tpu.memory_space<vmem>>, %arg4: memref<1x2x128xf32, #tpu.memory_space<vmem>>, %arg5: memref<1x2x128xf32, #tpu.memory_space<vmem>>, %arg6: memref<1x1x128xf32, #tpu.memory_space<vmem>>) attributes {dimension_semantics = [#tpu.dimension_semantics<parallel>, #tpu.dimension_semantics<parallel>], iteration_bounds = array<i64: 2, 1>, scalar_prefetch = 0 : i64, scratch_operands = 0 : i64, tpu.core_type = #tpu.core_type<tc>, window_params = [{transform_indices = @transform_0, window_bounds = array<i64: 1, 16, 128>}, {transform_indices = @transform_1, window_bounds = array<i64: 1, 16, 128>}, {transform_indices = @transform_2, window_bounds = array<i64: 1, 2, 128>}, {transform_indices = @transform_3, window_bounds = array<i64: 1, 2, 128>}, {transform_indices = @transform_4, window_bounds = array<i64: 1, 1, 128>}]} {
    %0 = tpu.iota {dimensions = array<i32: 1>} : vector<16x128xi32>
    %c0_i32 = arith.constant 0 : i32
    %1 = vector.broadcast %c0_i32 : i32 to vector<16x128xi32>
    %2 = arith.cmpi ne, %0, %1 : vector<16x128xi32>
    %c127_i32 = arith.constant 127 : i32
    %3 = vector.broadcast %c127_i32 : i32 to vector<16x128xi32>
    %4 = arith.cmpi ne, %0, %3 : vector<16x128xi32>
    %c0 = arith.constant 0 : index
    %c0_0 = arith.constant 0 : index
    %c0_1 = arith.constant 0 : index
    %5 = vector.load %arg2[%c0, %c0_0, %c0_1] : memref<1x16x128xf32, #tpu.memory_space<vmem>>, vector<1x16x128xf32>
    %6 = vector.shape_cast %5 : vector<1x16x128xf32> to vector<16x128xf32>
    %c0_2 = arith.constant 0 : index
    %c0_3 = arith.constant 0 : index
    %c0_4 = arith.constant 0 : index
    %7 = vector.load %arg4[%c0_2, %c0_3, %c0_4] : memref<1x2x128xf32, #tpu.memory_space<vmem>>, vector<1x2x128xf32>
    %8 = vector.shape_cast %7 : vector<1x2x128xf32> to vector<2x128xf32>
    %9 = vector.extract_strided_slice %8 {offsets = [0, 0], sizes = [1, 128], strides = [1, 1]} : vector<2x128xf32> to vector<1x128xf32>
    %10 = vector.extract_strided_slice %6 {offsets = [0, 0], sizes = [15, 128], strides = [1, 1]} : vector<16x128xf32> to vector<15x128xf32>
    %11 = tpu.concatenate %9, %10 in 0 : vector<1x128xf32>, vector<15x128xf32> -> vector<16x128xf32>
    %12 = vector.extract_strided_slice %6 {offsets = [1, 0], sizes = [15, 128], strides = [1, 1]} : vector<16x128xf32> to vector<15x128xf32>
    %13 = vector.extract_strided_slice %8 {offsets = [1, 0], sizes = [1, 128], strides = [1, 1]} : vector<2x128xf32> to vector<1x128xf32>
    %14 = tpu.concatenate %12, %13 in 0 : vector<15x128xf32>, vector<1x128xf32> -> vector<16x128xf32>
    %15 = arith.addf %6, %6 : vector<16x128xf32>
    %16 = arith.addf %11, %15 : vector<16x128xf32>
    %17 = arith.addf %16, %14 : vector<16x128xf32>
    %18 = arith.subf %11, %14 : vector<16x128xf32>
    %c1_i32 = arith.constant 1 : i32
    %19 = tpu.dynamic_rotate %17 by %c1_i32 dim 1 : vector<16x128xf32>, i32 -> vector<16x128xf32>
    %cst = arith.constant 0.000000e+00 : f32
    %20 = vector.broadcast %cst : f32 to vector<16x128xf32>
    %21 = arith.select %2, %19, %20 : vector<16x128xi1>, vector<16x128xf32>
    %c127_i32_5 = arith.constant 127 : i32
    %22 = tpu.dynamic_rotate %17 by %c127_i32_5 dim 1 : vector<16x128xf32>, i32 -> vector<16x128xf32>
    %cst_6 = arith.constant 0.000000e+00 : f32
    %23 = vector.broadcast %cst_6 : f32 to vector<16x128xf32>
    %24 = arith.select %4, %22, %23 : vector<16x128xi1>, vector<16x128xf32>
    %25 = arith.subf %21, %24 : vector<16x128xf32>
    %c1_i32_7 = arith.constant 1 : i32
    %26 = tpu.dynamic_rotate %18 by %c1_i32_7 dim 1 : vector<16x128xf32>, i32 -> vector<16x128xf32>
    %cst_8 = arith.constant 0.000000e+00 : f32
    %27 = vector.broadcast %cst_8 : f32 to vector<16x128xf32>
    %28 = arith.select %2, %26, %27 : vector<16x128xi1>, vector<16x128xf32>
    %29 = arith.addf %18, %18 : vector<16x128xf32>
    %30 = arith.addf %28, %29 : vector<16x128xf32>
    %c127_i32_9 = arith.constant 127 : i32
    %31 = tpu.dynamic_rotate %18 by %c127_i32_9 dim 1 : vector<16x128xf32>, i32 -> vector<16x128xf32>
    %cst_10 = arith.constant 0.000000e+00 : f32
    %32 = vector.broadcast %cst_10 : f32 to vector<16x128xf32>
    %33 = arith.select %4, %31, %32 : vector<16x128xi1>, vector<16x128xf32>
    %34 = arith.addf %30, %33 : vector<16x128xf32>
    %c0_11 = arith.constant 0 : index
    %c0_12 = arith.constant 0 : index
    %c0_13 = arith.constant 0 : index
    %35 = vector.load %arg3[%c0_11, %c0_12, %c0_13] : memref<1x16x128xf32, #tpu.memory_space<vmem>>, vector<1x16x128xf32>
    %36 = vector.shape_cast %35 : vector<1x16x128xf32> to vector<16x128xf32>
    %c0_14 = arith.constant 0 : index
    %c0_15 = arith.constant 0 : index
    %c0_16 = arith.constant 0 : index
    %37 = vector.load %arg5[%c0_14, %c0_15, %c0_16] : memref<1x2x128xf32, #tpu.memory_space<vmem>>, vector<1x2x128xf32>
    %38 = vector.shape_cast %37 : vector<1x2x128xf32> to vector<2x128xf32>
    %39 = vector.extract_strided_slice %38 {offsets = [0, 0], sizes = [1, 128], strides = [1, 1]} : vector<2x128xf32> to vector<1x128xf32>
    %40 = vector.extract_strided_slice %36 {offsets = [0, 0], sizes = [15, 128], strides = [1, 1]} : vector<16x128xf32> to vector<15x128xf32>
    %41 = tpu.concatenate %39, %40 in 0 : vector<1x128xf32>, vector<15x128xf32> -> vector<16x128xf32>
    %42 = vector.extract_strided_slice %36 {offsets = [1, 0], sizes = [15, 128], strides = [1, 1]} : vector<16x128xf32> to vector<15x128xf32>
    %43 = vector.extract_strided_slice %38 {offsets = [1, 0], sizes = [1, 128], strides = [1, 1]} : vector<2x128xf32> to vector<1x128xf32>
    %44 = tpu.concatenate %42, %43 in 0 : vector<15x128xf32>, vector<1x128xf32> -> vector<16x128xf32>
    %45 = arith.addf %36, %36 : vector<16x128xf32>
    %46 = arith.addf %41, %45 : vector<16x128xf32>
    %47 = arith.addf %46, %44 : vector<16x128xf32>
    %48 = arith.subf %41, %44 : vector<16x128xf32>
    %c1_i32_17 = arith.constant 1 : i32
    %49 = tpu.dynamic_rotate %47 by %c1_i32_17 dim 1 : vector<16x128xf32>, i32 -> vector<16x128xf32>
    %cst_18 = arith.constant 0.000000e+00 : f32
    %50 = vector.broadcast %cst_18 : f32 to vector<16x128xf32>
    %51 = arith.select %2, %49, %50 : vector<16x128xi1>, vector<16x128xf32>
    %c127_i32_19 = arith.constant 127 : i32
    %52 = tpu.dynamic_rotate %47 by %c127_i32_19 dim 1 : vector<16x128xf32>, i32 -> vector<16x128xf32>
    %cst_20 = arith.constant 0.000000e+00 : f32
    %53 = vector.broadcast %cst_20 : f32 to vector<16x128xf32>
    %54 = arith.select %4, %52, %53 : vector<16x128xi1>, vector<16x128xf32>
    %55 = arith.subf %51, %54 : vector<16x128xf32>
    %c1_i32_21 = arith.constant 1 : i32
    %56 = tpu.dynamic_rotate %48 by %c1_i32_21 dim 1 : vector<16x128xf32>, i32 -> vector<16x128xf32>
    %cst_22 = arith.constant 0.000000e+00 : f32
    %57 = vector.broadcast %cst_22 : f32 to vector<16x128xf32>
    %58 = arith.select %2, %56, %57 : vector<16x128xi1>, vector<16x128xf32>
    %59 = arith.addf %48, %48 : vector<16x128xf32>
    %60 = arith.addf %58, %59 : vector<16x128xf32>
    %c127_i32_23 = arith.constant 127 : i32
    %61 = tpu.dynamic_rotate %48 by %c127_i32_23 dim 1 : vector<16x128xf32>, i32 -> vector<16x128xf32>
    %cst_24 = arith.constant 0.000000e+00 : f32
    %62 = vector.broadcast %cst_24 : f32 to vector<16x128xf32>
    %63 = arith.select %4, %61, %62 : vector<16x128xi1>, vector<16x128xf32>
    %64 = arith.addf %60, %63 : vector<16x128xf32>
    %65 = arith.subf %6, %36 : vector<16x128xf32>
    %66 = math.absf %65 : vector<16x128xf32>
    %cst_25 = arith.constant 5.000000e-01 : f32
    %67 = vector.broadcast %cst_25 : f32 to vector<16x128xf32>
    %68 = arith.addf %66, %67 : vector<16x128xf32>
    %69 = arith.subf %25, %55 : vector<16x128xf32>
    %70 = math.absf %69 : vector<16x128xf32>
    %cst_26 = arith.constant 5.000000e-01 : f32
    %71 = vector.broadcast %cst_26 : f32 to vector<16x128xf32>
    %72 = arith.addf %70, %71 : vector<16x128xf32>
    %73 = arith.subf %34, %64 : vector<16x128xf32>
    %74 = math.absf %73 : vector<16x128xf32>
    %cst_27 = arith.constant 5.000000e-01 : f32
    %75 = vector.broadcast %cst_27 : f32 to vector<16x128xf32>
    %76 = arith.addf %74, %75 : vector<16x128xf32>
    %77 = arith.mulf %68, %72 : vector<16x128xf32>
    %78 = math.log %77 : vector<16x128xf32>
    %79 = math.log %76 : vector<16x128xf32>
    %80 = arith.addf %78, %79 : vector<16x128xf32>
    %81 = arith.mulf %25, %55 : vector<16x128xf32>
    %82 = arith.mulf %34, %64 : vector<16x128xf32>
    %83 = arith.addf %81, %82 : vector<16x128xf32>
    %cst_28 = arith.constant 1.000000e+00 : f32
    %84 = vector.broadcast %cst_28 : f32 to vector<16x128xf32>
    %85 = arith.addf %83, %84 : vector<16x128xf32>
    %86 = arith.mulf %25, %25 : vector<16x128xf32>
    %87 = arith.mulf %34, %34 : vector<16x128xf32>
    %88 = arith.addf %86, %87 : vector<16x128xf32>
    %cst_29 = arith.constant 1.000000e+00 : f32
    %89 = vector.broadcast %cst_29 : f32 to vector<16x128xf32>
    %90 = arith.addf %88, %89 : vector<16x128xf32>
    %91 = arith.mulf %55, %55 : vector<16x128xf32>
    %92 = arith.mulf %64, %64 : vector<16x128xf32>
    %93 = arith.addf %91, %92 : vector<16x128xf32>
    %cst_30 = arith.constant 1.000000e+00 : f32
    %94 = vector.broadcast %cst_30 : f32 to vector<16x128xf32>
    %95 = arith.addf %93, %94 : vector<16x128xf32>
    %96 = arith.mulf %90, %95 : vector<16x128xf32>
    %97 = math.rsqrt %96 : vector<16x128xf32>
    %98 = arith.mulf %85, %97 : vector<16x128xf32>
    %cst_31 = arith.constant 1.000000e+00 : f32
    %99 = vector.broadcast %cst_31 : f32 to vector<16x128xf32>
    %100 = arith.subf %99, %98 : vector<16x128xf32>
    %101 = math.absf %100 : vector<16x128xf32>
    %102 = arith.addf %80, %101 : vector<16x128xf32>
    %cst_32 = arith.constant dense<0.000000e+00> : vector<128xf32>
    %103 = vector.multi_reduction <add>, %102, %cst_32 [0] : vector<16x128xf32> to vector<128xf32>
    %104 = vector.shape_cast %103 : vector<128xf32> to vector<1x128xf32>
    %105 = vector.shape_cast %104 : vector<1x128xf32> to vector<1x1x128xf32>
    %c0_33 = arith.constant 0 : index
    %c0_34 = arith.constant 0 : index
    %c0_35 = arith.constant 0 : index
    %106 = vector.load %arg6[%c0_33, %c0_34, %c0_35] : memref<1x1x128xf32, #tpu.memory_space<vmem>>, vector<1x1x128xf32>
    tpu.vector_store %arg6[%c0_33, %c0_34, %c0_35], %105 {strides = array<i32>} : memref<1x1x128xf32, #tpu.memory_space<vmem>>, vector<1x1x128xf32>,
    return
  }
  func.func @transform_0(%arg0: i32, %arg1: i32) -> (i32, i32, i32) {
    %c0_i32 = arith.constant 0 : i32
    %c0_i32_0 = arith.constant 0 : i32
    return %arg0, %arg1, %c0_i32 : i32, i32, i32
  }
  func.func @transform_1(%arg0: i32, %arg1: i32) -> (i32, i32, i32) {
    %c0_i32 = arith.constant 0 : i32
    %c0_i32_0 = arith.constant 0 : i32
    return %arg0, %arg1, %c0_i32 : i32, i32, i32
  }
  func.func @transform_2(%arg0: i32, %arg1: i32) -> (i32, i32, i32) {
    %c1_i32 = arith.constant 1 : i32
    %0 = arith.muli %arg0, %c1_i32 : i32
    %1 = arith.addi %0, %arg1 : i32
    %c0_i32 = arith.constant 0 : i32
    %c0_i32_0 = arith.constant 0 : i32
    %c0_i32_1 = arith.constant 0 : i32
    return %1, %c0_i32, %c0_i32_0 : i32, i32, i32
  }
  func.func @transform_3(%arg0: i32, %arg1: i32) -> (i32, i32, i32) {
    %c1_i32 = arith.constant 1 : i32
    %0 = arith.muli %arg0, %c1_i32 : i32
    %1 = arith.addi %0, %arg1 : i32
    %c0_i32 = arith.constant 0 : i32
    %c0_i32_0 = arith.constant 0 : i32
    %c0_i32_1 = arith.constant 0 : i32
    return %1, %c0_i32, %c0_i32_0 : i32, i32, i32
  }
  func.func @transform_4(%arg0: i32, %arg1: i32) -> (i32, i32, i32) {
    %c1_i32 = arith.constant 1 : i32
    %0 = arith.muli %arg0, %c1_i32 : i32
    %1 = arith.addi %0, %arg1 : i32
    %c0_i32 = arith.constant 0 : i32
    %c0_i32_0 = arith.constant 0 : i32
    %c0_i32_1 = arith.constant 0 : i32
    return %1, %c0_i32, %c0_i32_0 : i32, i32, i32
  }
}

</mosaic_0001>

<llo_original>
// kernel: tpu_custom_call.1
$region0: #{tpu_custom_call.1}
  #allocation0 [shape = 'u32[]', space=smem, size = 0x4, offset = 0x4, fixed_abs, tag = 'smem constant byte address 0x4 - core index']
  #allocation1 [shape = 'u32[144,128]{1,0:T(1,128)}', space=vmem, size = 0x12000, scoped, tag = 'internal scratch']
  %s0 = inlined_call_operand.hbm [shape: f32[2,16,128], index: 0, kind: input, shape index: {}]
  %s1 = inlined_call_operand.hbm [shape: f32[2,16,128], index: 1, kind: input, shape index: {}]
  %s2 = inlined_call_operand.vmem [shape: f32[2,2,128], index: 2, kind: input, shape index: {}]
  %s3 = inlined_call_operand.vmem [shape: f32[2,2,128], index: 3, kind: input, shape index: {}]
  %s4 = inlined_call_operand.hbm [shape: f32[2,1,128], index: 4, kind: output, shape index: {}]
  %s5 = sld [smem:[#allocation0]]
  $region57: #{tpu_custom_call.1} parent=0
    _
  %s7 = ssub.s32 1, %s5
  %s8 = scalar_select 0, %s7, %s5
  $region1: #{tpu_custom_call.1} parent=0
    #allocation2 [shape = 'u8[16384]{0}', space=vmem, size = 0x4000, scoped, tag = 'input window, operand 0']
    #allocation3 [shape = 's32[2]{0}', space=sflag, size = 0x8, scoped, tag = 'scoped memory for tpu_custom_call.1']
    #allocation4 [shape = 's32[2]{0}', space=sflag, size = 0x8, scoped, tag = 'scoped memory for tpu_custom_call.1']
    #allocation5 [shape = 'u8[16384]{0}', space=vmem, size = 0x4000, scoped, tag = 'input window, operand 1']
    #allocation6 [shape = 's32[2]{0}', space=sflag, size = 0x8, scoped, tag = 'scoped memory for tpu_custom_call.1']
    #allocation7 [shape = 'u8[1024]{0}', space=vmem, size = 0x400, scoped, tag = 'output window, operand 0']
    %9 = vsyncpa [#allocation3], 0
    %s10 = scalar_lea.sflag [#allocation3], 1
    %11 = vsyncpa %s10, 0
    %12 = vsyncpa [#allocation6], 0
    %s13 = scalar_lea.sflag [#allocation6], 1
    %14 = vsyncpa %s13, 0
    %15 = vsyncpa [#allocation4], 0
    %s16 = scalar_lea.sflag [#allocation4], 1
    %17 = vsyncpa %s16, 0
    loop: start=0, step=1, limit=4
    $region2: #{tpu_custom_call.1} parent=1 // loop_pre_header
      _
    $region3: #{tpu_custom_call.1} parent=1 // loop_header
      %s19 = sphi 0, %s23
      %p20 = scmp.ge.s32.totalorder %s19, 4
      %s26 = sphi 0, %s38
      %s27 = sphi 0, %s34
      %s28 = sphi 0, %s26
      %s29 = sphi 0, %s27
      %s30 = sphi 0, %s28
      %s31 = sphi 0, %s29
      %s43 = sphi 0, %s45
      %s46 = sphi 0, %s43
      %s47 = sphi 0, %s46
      %s63 = sphi 0, %s47
      %s71 = sphi 0, %s73
      %s74 = sphi 0, %s71
      %s75 = sphi 0, %s74
      %s91 = sphi 0, %s75
      %s99 = sphi 0, %s101
      %s102 = sphi 0, %s99
      %s103 = sphi 0, %s102
      %s119 = sphi 0, %s103
      %s127 = sphi 0, %s129
      %s130 = sphi 0, %s127
      %s131 = sphi 0, %s130
      %s147 = sphi 0, %s131
      %s155 = sphi 0, %s157
      %s158 = sphi 0, %s155
      %s159 = sphi 0, %s158
      %s175 = sphi 0, %s159
    $region4: #{tpu_custom_call.1} parent=1 // loop_header_branch
      %22 = sbr.rel (%p20) target = $region8
    $region5: #{tpu_custom_call.1} parent=1 // loop_body
      %s24 = ssub.s32 %s19, 1
      %s25 = ssub.s32 %s19, 2
      %s32 = sadd.s32 1, %s27
      %p33 = scmp.ge.s32.totalorder %s32, 1
      %s34 = scalar_select %p33, 0, %s32
      %s35 = sadd.s32 1, %s26
      %s36 = scalar_select %p33, %s35, %s26
      %p37 = scmp.ge.s32.totalorder %s36, 2
      %s38 = scalar_select %p37, 0, %s36
      %s39 = ssub.s32 %s26, %s38
      %s40 = ssub.s32 %s27, %s34
      %s41 = sor.u32 %s39, %s40
      %p42 = scmp.eq.s32.totalorder %s41, 0
      %s44 = sadd.s32 %s43, 1
      %s45 = scalar_select %p42, %s43, %s44
      %p48 = pneg %p42
      %p49 = scmp.eq.s32.totalorder %s19, 1
      %p50 = por %p48, %p49
      %p51 = scmp.ne.s32.totalorder %s43, %s46
      %p52 = scmp.eq.s32.totalorder %s19, 0
      %p53 = por %p51, %p52
      %p54 = scmp.ne.s32.totalorder %s43, %s46
      %p55 = scmp.eq.s32.totalorder %s24, 1
      %p56 = por %p54, %p55
      %p57 = scmp.ne.s32.totalorder %s46, %s47
      %p58 = scmp.eq.s32.totalorder %s24, 0
      %p59 = por %p57, %p58
      %p60 = scmp.ne.s32.totalorder %s46, %s47
      %p61 = scmp.eq.s32.totalorder %s25, 1
      %p62 = por %p60, %p61
      %p64 = scmp.ne.s32.totalorder %s47, %s63
      %p65 = scmp.eq.s32.totalorder %s25, 0
      %p66 = por %p64, %p65
      %s67 = ssub.s32 %s26, %s38
      %s68 = ssub.s32 %s27, %s34
      %s69 = sor.u32 %s67, %s68
      %p70 = scmp.eq.s32.totalorder %s69, 0
      %s72 = sadd.s32 %s71, 1
      %s73 = scalar_select %p70, %s71, %s72
      %p76 = pneg %p70
      %p77 = scmp.eq.s32.totalorder %s19, 1
      %p78 = por %p76, %p77
      %p79 = scmp.ne.s32.totalorder %s71, %s74
      %p80 = scmp.eq.s32.totalorder %s19, 0
      %p81 = por %p79, %p80
      %p82 = scmp.ne.s32.totalorder %s71, %s74
      %p83 = scmp.eq.s32.totalorder %s24, 1
      %p84 = por %p82, %p83
      %p85 = scmp.ne.s32.totalorder %s74, %s75
      %p86 = scmp.eq.s32.totalorder %s24, 0
      %p87 = por %p85, %p86
      %p88 = scmp.ne.s32.totalorder %s74, %s75
      %p89 = scmp.eq.s32.totalorder %s25, 1
      %p90 = por %p88, %p89
      %p92 = scmp.ne.s32.totalorder %s75, %s91
      %p93 = scmp.eq.s32.totalorder %s25, 0
      %p94 = por %p92, %p93
      %s95 = sadd.s32 %s26, %s27
      %s96 = sadd.s32 %s38, %s34
      %s97 = ssub.s32 %s95, %s96
      %p98 = scmp.eq.s32.totalorder %s97, 0
      %s100 = sadd.s32 %s99, 1
      %s101 = scalar_select %p98, %s99, %s100
      %p104 = pneg %p98
      %p105 = scmp.eq.s32.totalorder %s19, 1
      %p106 = por %p104, %p105
      %p107 = scmp.ne.s32.totalorder %s99, %s102
      %p108 = scmp.eq.s32.totalorder %s19, 0
      %p109 = por %p107, %p108
      %p110 = scmp.ne.s32.totalorder %s99, %s102
      %p111 = scmp.eq.s32.totalorder %s24, 1
      %p112 = por %p110, %p111
      %p113 = scmp.ne.s32.totalorder %s102, %s103
      %p114 = scmp.eq.s32.totalorder %s24, 0
      %p115 = por %p113, %p114
      %p116 = scmp.ne.s32.totalorder %s102, %s103
      %p117 = scmp.eq.s32.totalorder %s25, 1
      %p118 = por %p116, %p117
      %p120 = scmp.ne.s32.totalorder %s103, %s119
      %p121 = scmp.eq.s32.totalorder %s25, 0
      %p122 = por %p120, %p121
      %s123 = sadd.s32 %s26, %s27
      %s124 = sadd.s32 %s38, %s34
      %s125 = ssub.s32 %s123, %s124
      %p126 = scmp.eq.s32.totalorder %s125, 0
      %s128 = sadd.s32 %s127, 1
      %s129 = scalar_select %p126, %s127, %s128
      %p132 = pneg %p126
      %p133 = scmp.eq.s32.totalorder %s19, 1
      %p134 = por %p132, %p133
      %p135 = scmp.ne.s32.totalorder %s127, %s130
      %p136 = scmp.eq.s32.totalorder %s19, 0
      %p137 = por %p135, %p136
      %p138 = scmp.ne.s32.totalorder %s127, %s130
      %p139 = scmp.eq.s32.totalorder %s24, 1
      %p140 = por %p138, %p139
      %p141 = scmp.ne.s32.totalorder %s130, %s131
      %p142 = scmp.eq.s32.totalorder %s24, 0
      %p143 = por %p141, %p142
      %p144 = scmp.ne.s32.totalorder %s130, %s131
      %p145 = scmp.eq.s32.totalorder %s25, 1
      %p146 = por %p144, %p145
      %p148 = scmp.ne.s32.totalorder %s131, %s147
      %p149 = scmp.eq.s32.totalorder %s25, 0
      %p150 = por %p148, %p149
      %s151 = sadd.s32 %s26, %s27
      %s152 = sadd.s32 %s38, %s34
      %s153 = ssub.s32 %s151, %s152
      %p154 = scmp.eq.s32.totalorder %s153, 0
      %s156 = sadd.s32 %s155, 1
      %s157 = scalar_select %p154, %s155, %s156
      %p160 = pneg %p154
      %p161 = scmp.eq.s32.totalorder %s19, 1
      %p162 = por %p160, %p161
      %p163 = scmp.ne.s32.totalorder %s155, %s158
      %p164 = scmp.eq.s32.totalorder %s19, 0
      %p165 = por %p163, %p164
      %p166 = scmp.ne.s32.totalorder %s155, %s158
      %p167 = scmp.eq.s32.totalorder %s24, 1
      %p168 = por %p166, %p167
      %p169 = scmp.ne.s32.totalorder %s158, %s159
      %p170 = scmp.eq.s32.totalorder %s24, 0
      %p171 = por %p169, %p170
      %p172 = scmp.ne.s32.totalorder %s158, %s159
      %p173 = scmp.eq.s32.totalorder %s25, 1
      %p174 = por %p172, %p173
      %p176 = scmp.ne.s32.totalorder %s159, %s175
      %p177 = scmp.eq.s32.totalorder %s25, 0
      %p178 = por %p176, %p177
      %p179 = scmp.le.s32.totalorder 1, %s19
      %p180 = scmp.lt.s32.totalorder %s19, 3
      %p181 = pnand %p179, %p180
      %p182 = pneg %p181
      // Predicated region
      $region9: #{tpu_custom_call.1} parent=5 // pred_check
        _
      $region10: #{tpu_custom_call.1} parent=5 // pred_check_branch
        %184 = sbr.rel (%p181) target = $region12
      $region11: #{tpu_custom_call.1} parent=5 // pred_region
        %s185 = ssub.s32 %s19, 1
      $region12: #{tpu_custom_call.1} parent=5 // pred_fallthru
        _
      %p186 = scmp.lt.s32.totalorder %s19, 2
      // Predicated region
      $region13: #{tpu_custom_call.1} parent=5 // pred_check
        %p187 = pneg %p186
      $region14: #{tpu_custom_call.1} parent=5 // pred_check_branch
        %189 = sbr.rel (%p187) target = $region16
      $region15: #{tpu_custom_call.1} parent=5 // pred_region
        // Predicated region
        $region17: #{tpu_custom_call.1} parent=15 // pred_check
          %p190 = pneg %p53
        $region18: #{tpu_custom_call.1} parent=15 // pred_check_branch
          %192 = sbr.rel (%p190) target = $region20
        $region19: #{tpu_custom_call.1} parent=15 // pred_region
          %s193 = sand.u32 %s43, 1
          %s194 = scalar_lea.sflag [#allocation3], %s193
          %s195 = sand.u32 %s43, 1
          %s196 = smul.addr %s195, 16
          %s197 = scalar_lea.vmem [#allocation2], %s196
          %s198 = smul.u32 2, %s27
          %s200 = ssub.s32 256, 256
          %201 = vsyncadd %s194, %s200
          %s202 = smul.addr %s26, 2
          %s203 = sadd.s32 %s198, %s202
          %s204 = smul.addr %s203, 128
          %s205 = scalar_lea.hbm %s0, %s204
          %s206 = sshll.u32 %s197, 4
          %s207 = int_to_ptr.vmem [resolvable:$true] %s206
          %212 = dma.hbm_to_vmem [thread:$0]  %s205, 256, %s207, %s194, 128, 128, 8
        $region20: #{tpu_custom_call.1} parent=15 // pred_fallthru
          _
        // Predicated region
        $region21: #{tpu_custom_call.1} parent=15 // pred_check
          %p213 = pneg %p81
        $region22: #{tpu_custom_call.1} parent=15 // pred_check_branch
          %215 = sbr.rel (%p213) target = $region24
        $region23: #{tpu_custom_call.1} parent=15 // pred_region
          %s216 = sand.u32 %s71, 1
          %s217 = scalar_lea.sflag [#allocation6], %s216
          %s218 = sand.u32 %s71, 1
          %s219 = smul.addr %s218, 16
          %s220 = scalar_lea.vmem [#allocation5], %s219
          %s221 = smul.u32 2, %s27
          %s223 = ssub.s32 256, 256
          %224 = vsyncadd %s217, %s223
          %s225 = smul.addr %s26, 2
          %s226 = sadd.s32 %s221, %s225
          %s227 = smul.addr %s226, 128
          %s228 = scalar_lea.hbm %s1, %s227
          %s229 = sshll.u32 %s220, 4
          %s230 = int_to_ptr.vmem [resolvable:$true] %s229
          %235 = dma.hbm_to_vmem [thread:$0]  %s228, 256, %s230, %s217, 128, 128, 8
        $region24: #{tpu_custom_call.1} parent=15 // pred_fallthru
          _
        // Predicated region
        $region25: #{tpu_custom_call.1} parent=15 // pred_check
          %p236 = pneg %p109
        $region26: #{tpu_custom_call.1} parent=15 // pred_check_branch
          %238 = sbr.rel (%p236) target = $region28
        $region27: #{tpu_custom_call.1} parent=15 // pred_region
          %s239 = sadd.s32 %s26, %s27
          %p240 = scmp.lt.s32.totalorder %s239, 1
          %s241 = scalar_select %p240, %s239, 1
          %s242 = smul.addr %s241, 2
          %s243 = scalar_lea.vmem %s2, %s242
          %s244 = sadd.s32 %s26, %s27
        $region28: #{tpu_custom_call.1} parent=15 // pred_fallthru
          _
        // Predicated region
        $region29: #{tpu_custom_call.1} parent=15 // pred_check
          %p245 = pneg %p137
        $region30: #{tpu_custom_call.1} parent=15 // pred_check_branch
          %247 = sbr.rel (%p245) target = $region32
        $region31: #{tpu_custom_call.1} parent=15 // pred_region
          %s248 = sadd.s32 %s26, %s27
          %p249 = scmp.lt.s32.totalorder %s248, 1
          %s250 = scalar_select %p249, %s248, 1
          %s251 = smul.addr %s250, 2
          %s252 = scalar_lea.vmem %s3, %s251
          %s253 = sadd.s32 %s26, %s27
        $region32: #{tpu_custom_call.1} parent=15 // pred_fallthru
          _
      $region16: #{tpu_custom_call.1} parent=5 // pred_fallthru
        _
      %p254 = scmp.le.s32.totalorder 1, %s19
      %p255 = scmp.lt.s32.totalorder %s19, 3
      %p256 = pnand %p254, %p255
      %p257 = pneg %p256
      // Predicated region
      $region33: #{tpu_custom_call.1} parent=5 // pred_check
        _
      $region34: #{tpu_custom_call.1} parent=5 // pred_check_branch
        %259 = sbr.rel (%p256) target = $region36
      $region35: #{tpu_custom_call.1} parent=5 // pred_region
        %s260 = ssub.s32 %s19, 1
        %s261 = sand.u32 %s46, 1
        %s262 = scalar_lea.sflag [#allocation3], %s261
        %s263 = sand.u32 %s46, 1
        %s264 = smul.addr %s263, 16
        %s265 = scalar_lea.vmem [#allocation2], %s264
        // Predicated region
        $region37: #{tpu_custom_call.1} parent=35 // pred_check
          %p266 = pneg %p59
        $region38: #{tpu_custom_call.1} parent=35 // pred_check_branch
          %268 = sbr.rel (%p266) target = $region40
        $region39: #{tpu_custom_call.1} parent=35 // pred_region
          %269 = dma.done %s262, 256
        $region40: #{tpu_custom_call.1} parent=35 // pred_fallthru
          _
        %s270 = sand.u32 %s74, 1
        %s271 = scalar_lea.sflag [#allocation6], %s270
        %s272 = sand.u32 %s74, 1
        %s273 = smul.addr %s272, 16
        %s274 = scalar_lea.vmem [#allocation5], %s273
        // Predicated region
        $region41: #{tpu_custom_call.1} parent=35 // pred_check
          %p275 = pneg %p87
        $region42: #{tpu_custom_call.1} parent=35 // pred_check_branch
          %277 = sbr.rel (%p275) target = $region44
        $region43: #{tpu_custom_call.1} parent=35 // pred_region
          %278 = dma.done %s271, 256
        $region44: #{tpu_custom_call.1} parent=35 // pred_fallthru
          _
        %s279 = sand.u32 %s46, 1
        %s280 = scalar_lea.sflag [#allocation3], %s279
        %s281 = sand.u32 %s46, 1
        %s282 = smul.addr %s281, 16
        %s283 = scalar_lea.vmem [#allocation2], %s282
        %p284 = pneg %p59
        %p285 = pneg %p56
        %s286 = sand.u32 %s74, 1
        %s287 = scalar_lea.sflag [#allocation6], %s286
        %s288 = sand.u32 %s74, 1
        %s289 = smul.addr %s288, 16
        %s290 = scalar_lea.vmem [#allocation5], %s289
        %p291 = pneg %p87
        %p292 = pneg %p84
        %s293 = sadd.s32 %s28, %s29
        %p294 = scmp.lt.s32.totalorder %s293, 1
        %s295 = scalar_select %p294, %s293, 1
        %s296 = smul.addr %s295, 2
        %s297 = scalar_lea.vmem %s2, %s296
        %p298 = pneg %p115
        %p299 = pneg %p112
        %s300 = sadd.s32 %s28, %s29
        %p301 = scmp.lt.s32.totalorder %s300, 1
        %s302 = scalar_select %p301, %s300, 1
        %s303 = smul.addr %s302, 2
        %s304 = scalar_lea.vmem %s3, %s303
        %p305 = pneg %p143
        %p306 = pneg %p140
        %p307 = pneg %p171
        %p308 = pneg %p168
        %s309 = sand.u32 %s158, 1
        %s310 = scalar_lea.sflag [#allocation4], %s309
        %s311 = sand.u32 %s158, 1
        %s312 = scalar_lea.vmem [#allocation7], %s311
        %s313 = smul.u32 2, %s29
        %s314 = smul.u32 2, %s29
        %s315 = sadd.s32 %s28, %s29
        %p316 = scmp.lt.s32.totalorder %s315, 1
        %s317 = scalar_select %p316, %s315, 1
        %s318 = smul.addr %s317, 2
        %s319 = scalar_lea.vmem %s2, %s318
        %s320 = sadd.s32 %s28, %s29
        %s321 = sadd.s32 %s28, %s29
        %p322 = scmp.lt.s32.totalorder %s321, 1
        %s323 = scalar_select %p322, %s321, 1
        %s324 = smul.addr %s323, 2
        %s325 = scalar_lea.vmem %s3, %s324
        %s326 = sadd.s32 %s28, %s29
        %s327 = sadd.s32 %s28, %s29
        %v328 = vlaneseq
        %v329 = vand.u32 %v328, 127
        %vm330 = vcmp.ne.s32.totalorder %v329, 0
        %vm331 = vcmp.ne.s32.totalorder %v329, 127
        %v332 = vld [vmem:[%s265] sm:$0xff]
        %v333 = vld [vmem:[%s265 + $0x8] sm:$0xff]
        %v334 = vld [vmem:[%s319] sm:$0x3]
        %vm337 = vcmask 1040384
        %v338 = vrot.slane %v332, 7
        %v339 = vrot.slane %v333, 7
        %v340 = vsel %vm337, %v338, %v339
        %v343 = vsel %vm337, %v334, %v338
        %vm344 = vcmask 1046528
        %v345 = vrot.slane %v332, 1
        %v346 = vrot.slane %v333, 1
        %v347 = vsel %vm344, %v345, %v346
        %v351 = vrot.slane %v334, 2
        %v353 = vsel %vm344, %v346, %v351
        %v354 = vadd.f32 %v332, %v332
        %v355 = vadd.f32 %v333, %v333
        %v356 = vadd.f32 %v343, %v354
        %v357 = vadd.f32 %v340, %v355
        %v358 = vadd.f32 %v356, %v347
        %v359 = vadd.f32 %v357, %v353
        %v360 = vsub.f32 %v343, %v347
        %v361 = vsub.f32 %v340, %v353
        %362 = vrot.lane.b32.xlu0 %v358, 1
        %v363 = vpop.permute.xlu0 %362
        %364 = vrot.lane.b32.xlu0 %v359, 1
        %v365 = vpop.permute.xlu0 %364
        %v366 = vsel %vm330, %v363, 0.0
        %v367 = vsel %vm330, %v365, 0.0
        %368 = vrot.lane.b32.xlu0 %v358, 127
        %v369 = vpop.permute.xlu0 %368
        %370 = vrot.lane.b32.xlu0 %v359, 127
        %v371 = vpop.permute.xlu0 %370
        %v372 = vsel %vm331, %v369, 0.0
        %v373 = vsel %vm331, %v371, 0.0
        %v374 = vsub.f32 %v366, %v372
        %v375 = vsub.f32 %v367, %v373
        %376 = vrot.lane.b32.xlu0 %v360, 1
        %v377 = vpop.permute.xlu0 %376
        %378 = vrot.lane.b32.xlu0 %v361, 1
        %v379 = vpop.permute.xlu0 %378
        %v380 = vsel %vm330, %v377, 0.0
        %v381 = vsel %vm330, %v379, 0.0
        %v382 = vadd.f32 %v360, %v360
        %v383 = vadd.f32 %v361, %v361
        %v384 = vadd.f32 %v380, %v382
        %v385 = vadd.f32 %v381, %v383
        %386 = vrot.lane.b32.xlu0 %v360, 127
        %v387 = vpop.permute.xlu0 %386
        %388 = vrot.lane.b32.xlu0 %v361, 127
        %v389 = vpop.permute.xlu0 %388
        %v390 = vsel %vm331, %v387, 0.0
        %v391 = vsel %vm331, %v389, 0.0
        %v392 = vadd.f32 %v384, %v390
        %v393 = vadd.f32 %v385, %v391
        %v394 = vld [vmem:[%s274] sm:$0xff]
        %v395 = vld [vmem:[%s274 + $0x8] sm:$0xff]
        %v396 = vld [vmem:[%s325] sm:$0x3]
        %v399 = vrot.slane %v394, 7
        %v400 = vrot.slane %v395, 7
        %v401 = vsel %vm337, %v399, %v400
        %v404 = vsel %vm337, %v396, %v399
        %v405 = vrot.slane %v394, 1
        %v406 = vrot.slane %v395, 1
        %v407 = vsel %vm344, %v405, %v406
        %v411 = vrot.slane %v396, 2
        %v413 = vsel %vm344, %v406, %v411
        %v414 = vadd.f32 %v394, %v394
        %v415 = vadd.f32 %v395, %v395
        %v416 = vadd.f32 %v404, %v414
        %v417 = vadd.f32 %v401, %v415
        %v418 = vadd.f32 %v416, %v407
        %v419 = vadd.f32 %v417, %v413
        %v420 = vsub.f32 %v404, %v407
        %v421 = vsub.f32 %v401, %v413
        %422 = vrot.lane.b32.xlu0 %v418, 1
        %v423 = vpop.permute.xlu0 %422
        %424 = vrot.lane.b32.xlu0 %v419, 1
        %v425 = vpop.permute.xlu0 %424
        %v426 = vsel %vm330, %v423, 0.0
        %v427 = vsel %vm330, %v425, 0.0
        %428 = vrot.lane.b32.xlu0 %v418, 127
        %v429 = vpop.permute.xlu0 %428
        %430 = vrot.lane.b32.xlu0 %v419, 127
        %v431 = vpop.permute.xlu0 %430
        %v432 = vsel %vm331, %v429, 0.0
        %v433 = vsel %vm331, %v431, 0.0
        %v434 = vsub.f32 %v426, %v432
        %v435 = vsub.f32 %v427, %v433
        %436 = vrot.lane.b32.xlu0 %v420, 1
        %v437 = vpop.permute.xlu0 %436
        %438 = vrot.lane.b32.xlu0 %v421, 1
        %v439 = vpop.permute.xlu0 %438
        %v440 = vsel %vm330, %v437, 0.0
        %v441 = vsel %vm330, %v439, 0.0
        %v442 = vadd.f32 %v420, %v420
        %v443 = vadd.f32 %v421, %v421
        %v444 = vadd.f32 %v440, %v442
        %v445 = vadd.f32 %v441, %v443
        %446 = vrot.lane.b32.xlu0 %v420, 127
        %v447 = vpop.permute.xlu0 %446
        %448 = vrot.lane.b32.xlu0 %v421, 127
        %v449 = vpop.permute.xlu0 %448
        %v450 = vsel %vm331, %v447, 0.0
        %v451 = vsel %vm331, %v449, 0.0
        %v452 = vadd.f32 %v444, %v450
        %v453 = vadd.f32 %v445, %v451
        %v454 = vsub.f32 %v332, %v394
        %v455 = vsub.f32 %v333, %v395
        %v456 = vand.u32 2147483647, %v454
        %v457 = vand.u32 2147483647, %v455
        %v458 = vadd.f32 %v456, 0.5
        %v459 = vadd.f32 %v457, 0.5
        %v460 = vsub.f32 %v374, %v434
        %v461 = vsub.f32 %v375, %v435
        %v462 = vand.u32 2147483647, %v460
        %v463 = vand.u32 2147483647, %v461
        %v464 = vadd.f32 %v462, 0.5
        %v465 = vadd.f32 %v463, 0.5
        %v466 = vsub.f32 %v392, %v452
        %v467 = vsub.f32 %v393, %v453
        %v468 = vand.u32 2147483647, %v466
        %v469 = vand.u32 2147483647, %v467
        %v470 = vadd.f32 %v468, 0.5
        %v471 = vadd.f32 %v469, 0.5
        %v472 = vmul.f32 %v458, %v464
        %v473 = vmul.f32 %v459, %v465
        %v474 = vlog2.pop %v472
        %v475 = vmul.f32 %v474, 0.6931472
        %v476 = vlog2.pop %v473
        %v477 = vmul.f32 %v476, 0.6931472
        %v478 = vlog2.pop %v470
        %v479 = vmul.f32 %v478, 0.6931472
        %v480 = vlog2.pop %v471
        %v481 = vmul.f32 %v480, 0.6931472
        %v482 = vadd.f32 %v475, %v479
        %v483 = vadd.f32 %v477, %v481
        %v484 = vmul.f32 %v374, %v434
        %v485 = vmul.f32 %v375, %v435
        %v486 = vmul.f32 %v392, %v452
        %v487 = vmul.f32 %v393, %v453
        %v488 = vadd.f32 %v484, %v486
        %v489 = vadd.f32 %v485, %v487
        %v490 = vadd.f32 %v488, 1.0
        %v491 = vadd.f32 %v489, 1.0
        %v492 = vmul.f32 %v374, %v374
        %v493 = vmul.f32 %v375, %v375
        %v494 = vmul.f32 %v392, %v392
        %v495 = vmul.f32 %v393, %v393
        %v496 = vadd.f32 %v492, %v494
        %v497 = vadd.f32 %v493, %v495
        %v498 = vadd.f32 %v496, 1.0
        %v499 = vadd.f32 %v497, 1.0
        %v500 = vmul.f32 %v434, %v434
        %v501 = vmul.f32 %v435, %v435
        %v502 = vmul.f32 %v452, %v452
        %v503 = vmul.f32 %v453, %v453
        %v504 = vadd.f32 %v500, %v502
        %v505 = vadd.f32 %v501, %v503
        %v506 = vadd.f32 %v504, 1.0
        %v507 = vadd.f32 %v505, 1.0
        %v508 = vmul.f32 %v498, %v506
        %v509 = vmul.f32 %v499, %v507
        %v510 = vrsqrt.pop %v508
        %v511 = vrsqrt.pop %v509
        %v512 = vmul.f32 %v490, %v510
        %v513 = vmul.f32 %v491, %v511
        %v514 = vsub.f32 1.0, %v512
        %v515 = vsub.f32 1.0, %v513
        %v516 = vand.u32 2147483647, %v514
        %v517 = vand.u32 2147483647, %v515
        %v518 = vadd.f32 %v482, %v516
        %v519 = vadd.f32 %v483, %v517
        %v520 = vadd.f32 %v518, %v519
        %v521 = vrot.slane %v520, 4
        %v522 = vadd.f32 %v520, %v521
        %v523 = vrot.slane %v522, 2
        %v524 = vadd.f32 %v522, %v523
        %v525 = vrot.slane %v524, 1
        %v526 = vadd.f32 %v524, %v525
        %527 = vst [vmem:[%s312] sm:$0x1] %v526
        %s528 = sand.u32 %s158, 1
        %s529 = scalar_lea.sflag [#allocation4], %s528
        %s530 = sand.u32 %s158, 1
        %s531 = scalar_lea.vmem [#allocation7], %s530
        // Predicated region
        $region45: #{tpu_custom_call.1} parent=35 // pred_check
          %p532 = pneg %p168
        $region46: #{tpu_custom_call.1} parent=35 // pred_check_branch
          %534 = sbr.rel (%p532) target = $region48
        $region47: #{tpu_custom_call.1} parent=35 // pred_region
          %s535 = sadd.s32 %s28, %s29
          %s537 = ssub.s32 16, 16
          %538 = vsyncadd %s529, %s537
          %s539 = smul.addr %s535, 16
          %s540 = scalar_lea.hbm %s4, %s539
          %s542 = sshll.u32 %s531, 4
          %s543 = int_to_ptr.vmem [resolvable:$true] %s542
          %545 = dma.vmem_to_hbm [thread:$0]  %s543, 16, %s540, %s529
        $region48: #{tpu_custom_call.1} parent=35 // pred_fallthru
          _
      $region36: #{tpu_custom_call.1} parent=5 // pred_fallthru
        _
      %p546 = scmp.le.s32.totalorder 2, %s19
      // Predicated region
      $region49: #{tpu_custom_call.1} parent=5 // pred_check
        %p547 = pneg %p546
      $region50: #{tpu_custom_call.1} parent=5 // pred_check_branch
        %549 = sbr.rel (%p547) target = $region52
      $region51: #{tpu_custom_call.1} parent=5 // pred_region
        %s550 = ssub.s32 %s19, 2
        // Predicated region
        $region53: #{tpu_custom_call.1} parent=51 // pred_check
          %p551 = pneg %p174
        $region54: #{tpu_custom_call.1} parent=51 // pred_check_branch
          %553 = sbr.rel (%p551) target = $region56
        $region55: #{tpu_custom_call.1} parent=51 // pred_region
          %s554 = sand.u32 %s159, 1
          %s555 = scalar_lea.sflag [#allocation4], %s554
          %s556 = sand.u32 %s159, 1
          %s557 = scalar_lea.vmem [#allocation7], %s556
          %558 = dma.done %s555, 16
        $region56: #{tpu_custom_call.1} parent=51 // pred_fallthru
          _
      $region52: #{tpu_custom_call.1} parent=5 // pred_fallthru
        _
    $region6: #{tpu_custom_call.1} parent=1 // loop_footer
      %s23 = sadd.s32 1, %s19
    $region7: #{tpu_custom_call.1} parent=1 // loop_footer_branch
      %18 = sbr.rel target = $region3
    $region8: #{tpu_custom_call.1} parent=1 // loop_exit
      _
    %559 = vsyncpa [#allocation3], 1
    %s560 = scalar_lea.sflag [#allocation3], 1
    %561 = vsyncpa %s560, 1
    %562 = vsyncpa [#allocation6], 1
    %s563 = scalar_lea.sflag [#allocation6], 1
    %564 = vsyncpa %s563, 1
    %565 = vsyncpa [#allocation4], 1
    %s566 = scalar_lea.sflag [#allocation4], 1
    %567 = vsyncpa %s566, 1

</llo_original>
